<compile_context>
chip_gen: v7x
topology: tpu7x:2x2x1
jax: 0.10.0
libtpu: 0.0.40
codegen_flags: <defaults>
</compile_context>

<pallas_src>
import jax
import jax.numpy as jnp
from jax.experimental import pallas as pl
from jax.experimental.pallas import tpu as pltpu


_LANE = 128
_NEG_PAD = -1e30  # bias for padded class lanes -> exp() underflows to 0 in softmax


def _round_up(x, m):
    return ((x + m - 1) // m) * m


def _pick_tile(n, target):
    """Largest power-of-two-ish tile <= target that evenly divides n."""
    if n <= target:
        return n
    t = target
    while n % t != 0:
        t //= 2
        if t < 8:
            # TODO(synk): pad N up to a tile multiple instead of one full-row block.
            return n
    return t


def _pad_to(arr, shape, fill=0.0):
    pads = [(0, t - s) for s, t in zip(arr.shape, shape)]
    return jnp.pad(arr, pads, constant_values=fill)


# --------------------------------------------------------------------------
# Kernel 1: dense feature projection  XW = X @ W  (row-tiled over nodes).
# --------------------------------------------------------------------------
def _project_kernel(x_ref, w_ref, o_ref):
    o_ref[...] = jnp.dot(
        x_ref[...], w_ref[...], preferred_element_type=jnp.float32
    ).astype(o_ref.dtype)


def _project(x, w, *, tm, out_dtype=jnp.bfloat16):
    n, k = x.shape
    f = w.shape[1]
    return pl.pallas_call(
        _project_kernel,
        out_shape=jax.ShapeDtypeStruct((n, f), out_dtype),
        grid_spec=pltpu.PrefetchScalarGridSpec(
            num_scalar_prefetch=0,
            grid=(n // tm,),
            in_specs=[
                pl.BlockSpec((tm, k), lambda i: (i, 0)),
                pl.BlockSpec((k, f), lambda i: (0, 0)),
            ],
            out_specs=pl.BlockSpec((tm, f), lambda i: (i, 0)),
        ),
        compiler_params=pltpu.CompilerParams(dimension_semantics=("parallel",)),
    )(x, w)


# --------------------------------------------------------------------------
# Kernel 2: layer-1 aggregation  A_hat @ XW1, finalize fuses bias + ReLU and
# the second projection (H1 @ W2), so H1 never hits HBM.
# --------------------------------------------------------------------------
def _agg_relu_project_kernel(a_ref, xw_ref, b_ref, w2_ref, o_ref, acc_ref):
    k = pl.program_id(1)

    @pl.when(k == 0)
    def _():
        acc_ref[...] = jnp.zeros_like(acc_ref)

    acc_ref[...] += jnp.dot(
        a_ref[...], xw_ref[...], preferred_element_type=jnp.float32
    )

    @pl.when(k == pl.num_programs(1) - 1)
    def _():
        h1 = jnp.maximum(acc_ref[...] + b_ref[...], 0.0).astype(w2_ref.dtype)
        o_ref[...] = jnp.dot(
            h1, w2_ref[...], preferred_element_type=jnp.float32
        ).astype(o_ref.dtype)


def _agg_relu_project(a, xw, b, w2, *, tm, tk):
    n = a.shape[0]
    h = xw.shape[1]
    c = w2.shape[1]
    return pl.pallas_call(
        _agg_relu_project_kernel,
        out_shape=jax.ShapeDtypeStruct((n, c), jnp.bfloat16),
        grid_spec=pltpu.PrefetchScalarGridSpec(
            num_scalar_prefetch=0,
            grid=(n // tm, n // tk),
            in_specs=[
                pl.BlockSpec((tm, tk), lambda i, k: (i, k)),  # A_hat tile (bf16)
                pl.BlockSpec((tk, h), lambda i, k: (k, 0)),   # XW1 K-slice (bf16)
                pl.BlockSpec((1, h), lambda i, k: (0, 0)),    # bias1 (f32)
                pl.BlockSpec((h, c), lambda i, k: (0, 0)),    # W2 (bf16, VMEM-resident)
            ],
            out_specs=pl.BlockSpec((tm, c), lambda i, k: (i, 0)),
            scratch_shapes=[pltpu.VMEM((tm, h), jnp.float32)],
        ),
        compiler_params=pltpu.CompilerParams(
            dimension_semantics=("parallel", "arbitrary")
        ),
    )(a, xw, b, w2)


# --------------------------------------------------------------------------
# Kernel 3: layer-2 aggregation  A_hat @ XW2, finalize fuses bias + row-wise
# log_softmax over the lane (class) axis.
# --------------------------------------------------------------------------
def _agg_logsoftmax_kernel(a_ref, xw_ref, b_ref, o_ref, acc_ref):
    k = pl.program_id(1)

    @pl.when(k == 0)
    def _():
        acc_ref[...] = jnp.zeros_like(acc_ref)

    acc_ref[...] += jnp.dot(
        a_ref[...], xw_ref[...], preferred_element_type=jnp.float32
    )

    @pl.when(k == pl.num_programs(1) - 1)
    def _():
        h = acc_ref[...] + b_ref[...]          # bias fused in finalize (f32)
        m = jnp.max(h, axis=-1, keepdims=True)
        z = h - m
        lse = jnp.log(jnp.sum(jnp.exp(z), axis=-1, keepdims=True))
        o_ref[...] = (z - lse).astype(o_ref.dtype)


def _agg_logsoftmax(a, xw, b, *, tm, tk):
    n = a.shape[0]
    c = xw.shape[1]
    return pl.pallas_call(
        _agg_logsoftmax_kernel,
        out_shape=jax.ShapeDtypeStruct((n, c), jnp.float32),
        grid_spec=pltpu.PrefetchScalarGridSpec(
            num_scalar_prefetch=0,
            grid=(n // tm, n // tk),
            in_specs=[
                pl.BlockSpec((tm, tk), lambda i, k: (i, k)),  # A_hat tile (bf16)
                pl.BlockSpec((tk, c), lambda i, k: (k, 0)),   # XW2 K-slice (bf16)
                pl.BlockSpec((1, c), lambda i, k: (0, 0)),    # bias2 (f32, -1e30 pad)
            ],
            out_specs=pl.BlockSpec((tm, c), lambda i, k: (i, 0)),
            scratch_shapes=[pltpu.VMEM((tm, c), jnp.float32)],
        ),
        compiler_params=pltpu.CompilerParams(
            dimension_semantics=("parallel", "arbitrary")
        ),
    )(a, xw, b)


# --------------------------------------------------------------------------
# Full 2-layer GCN forward.
# --------------------------------------------------------------------------
def gnn_forward(a_hat, x, w1, b1, w2, b2):
    n, f_in = x.shape
    hidden = w1.shape[1]
    num_classes = w2.shape[1]

    h_pad = _round_up(hidden, _LANE)
    c_pad = _round_up(num_classes, _LANE)

    # Lane-dense (multiple-of-128) padding of weights / biases.
    w1p = _pad_to(w1, (f_in, h_pad)).astype(jnp.bfloat16)
    b1p = _pad_to(b1.reshape(1, -1), (1, h_pad)).astype(jnp.float32)
    w2p = _pad_to(w2, (h_pad, c_pad)).astype(jnp.bfloat16)
    b2p = _pad_to(b2.reshape(1, -1), (1, c_pad), fill=_NEG_PAD).astype(jnp.float32)

    a_bf = a_hat.astype(jnp.bfloat16)
    x_bf = x.astype(jnp.bfloat16)

    tm = _pick_tile(n, 256)  # row tile (parallel axis)
    tk = _pick_tile(n, 512)  # reduction tile over A_hat columns

    # ----- layer 1 projection: XW1 = X @ W1 (done once, row-tiled) -----
    xw1 = _project(x_bf, w1p, tm=tm)                                   # (N, h_pad) bf16

    # ----- layer 1 aggregation + ReLU, fused with layer-2 projection -----
    xw2 = _agg_relu_project(a_bf, xw1, b1p, w2p, tm=tm, tk=tk)         # (N, c_pad) bf16

    # ----- layer 2 aggregation + bias + log_softmax -----
    out_pad = _agg_logsoftmax(a_bf, xw2, b2p, tm=tm, tk=tk)            # (N, c_pad) f32
    return out_pad[:, :num_classes]


# --------------------------------------------------------------------------
# Plain-JAX glue + references.
# --------------------------------------------------------------------------
def build_norm_adj(edge_index, num_nodes):
    """Dense D^{-1/2}(A+I)D^{-1/2} from a (2, E) edge_index.

    Uses .add so duplicate edges are counted (matches PyG scatter-add semantics).
    """
    src, dst = edge_index[0], edge_index[1]
    loops = jnp.arange(num_nodes, dtype=edge_index.dtype)
    src = jnp.concatenate([src, loops])
    dst = jnp.concatenate([dst, loops])
    a = jnp.zeros((num_nodes, num_nodes), jnp.float32).at[dst, src].add(1.0)
    deg = a.sum(axis=1)
    dinv = jnp.where(deg > 0, 1.0 / jnp.sqrt(deg), 0.0)
    return dinv[:, None] * a * dinv[None, :]


def log_softmax_ref(x):
    z = x - jnp.max(x, axis=1, keepdims=True)
    return z - jnp.log(jnp.sum(jnp.exp(z), axis=1, keepdims=True))


def ref_f32(a_hat, x, w1, b1, w2, b2):
    h1 = jnp.maximum(a_hat @ (x @ w1) + b1, 0.0)
    h2 = a_hat @ (h1 @ w2) + b2
    return log_softmax_ref(h2)


def ref_bf16(a_hat, x, w1, b1, w2, b2):
    """Mirrors the kernel's bf16-operand / f32-accumulate dataflow exactly."""
    bf = jnp.bfloat16
    a = a_hat.astype(bf)
    xw1 = jnp.dot(x.astype(bf), w1.astype(bf),
                  preferred_element_type=jnp.float32).astype(bf)
    h1 = jnp.maximum(jnp.dot(a, xw1, preferred_element_type=jnp.float32) + b1,
                     0.0).astype(bf)
    xw2 = jnp.dot(h1, w2.astype(bf),
                  preferred_element_type=jnp.float32).astype(bf)
    h2 = jnp.dot(a, xw2, preferred_element_type=jnp.float32) + b2
    return log_softmax_ref(h2)


if __name__ == "__main__":
    # Small, deterministic problem: 16 nodes, 8 features, hidden 32, 4 classes.
    num_nodes, num_features, hidden_dim, num_classes = 16, 8, 32, 4

    key = jax.random.PRNGKey(0)
    kx, ke, k1, k2 = jax.random.split(key, 4)

    x = jax.random.normal(kx, (num_nodes, num_features), jnp.float32)
    edge_index = jax.random.randint(ke, (2, 40), 0, num_nodes, jnp.int32)

    # Deterministic parameter init (Glorot-uniform-like weights, zero biases).
    lim1 = jnp.sqrt(6.0 / (num_features + hidden_dim))
    lim2 = jnp.sqrt(6.0 / (hidden_dim + num_classes))
    w1 = jax.random.uniform(k1, (num_features, hidden_dim), jnp.float32, -lim1, lim1)
    b1 = jnp.zeros((1, hidden_dim), jnp.float32)
    w2 = jax.random.uniform(k2, (hidden_dim, num_classes), jnp.float32, -lim2, lim2)
    b2 = jnp.zeros((1, num_classes), jnp.float32)

    a_hat = build_norm_adj(edge_index, num_nodes)

    out = gnn_forward(a_hat, x, w1, b1, w2, b2)
    out = jax.block_until_ready(out)

    # Exact check against a reference that mirrors the kernel's bf16 dataflow.
    r_bf16 = ref_bf16(a_hat, x, w1, b1, w2, b2)
    assert jnp.allclose(out, r_bf16, atol=1e-3, rtol=1e-3), "mismatch vs bf16 reference"

    # Looser semantic check against the pure-f32 reference (bf16 quantization noise).
    r_f32 = ref_f32(a_hat, x, w1, b1, w2, b2)
    assert jnp.allclose(out, r_f32, atol=5e-2, rtol=5e-2), "mismatch vs f32 reference"

    print("KERNEL_OK")
</pallas_src>

<mosaic_0001>
module attributes {stable_mosaic.version = 11 : i64} {
  func.func @_project_kernel(%arg0: i32, %arg1: memref<16x8xbf16, #tpu.memory_space<vmem>>, %arg2: memref<8x128xbf16, #tpu.memory_space<vmem>>, %arg3: memref<16x128xbf16, #tpu.memory_space<vmem>>) attributes {dimension_semantics = [#tpu.dimension_semantics<parallel>], iteration_bounds = array<i64: 1>, scalar_prefetch = 0 : i64, scratch_operands = 0 : i64, tpu.core_type = #tpu.core_type<tc>, window_params = [{transform_indices = @transform_0, window_bounds = array<i64: 16, 8>}, {pipeline_mode = #tpu.pipeline_mode<synchronous>, transform_indices = @transform_1, window_bounds = array<i64: 8, 128>}, {transform_indices = @transform_2, window_bounds = array<i64: 16, 128>}]} {
    %c0 = arith.constant 0 : index
    %c0_0 = arith.constant 0 : index
    %0 = vector.load %arg1[%c0, %c0_0] : memref<16x8xbf16, #tpu.memory_space<vmem>>, vector<16x8xbf16>
    %c0_1 = arith.constant 0 : index
    %c0_2 = arith.constant 0 : index
    %1 = vector.load %arg2[%c0_1, %c0_2] : memref<8x128xbf16, #tpu.memory_space<vmem>>, vector<8x128xbf16>
    %cst = arith.constant dense<0.000000e+00> : vector<16x128xf32>
    %2 = tpu.matmul %0, %1, %cst {dimension_numbers = #tpu.dot_dimension_numbers<[1], [0], [0], [1], [0, 0, 1, 1], [], []>} : vector<16x8xbf16>, vector<8x128xbf16>, vector<16x128xf32> -> vector<16x128xf32>
    %3 = arith.truncf %2 : vector<16x128xf32> to vector<16x128xbf16>
    %c0_3 = arith.constant 0 : index
    %c0_4 = arith.constant 0 : index
    %4 = vector.load %arg3[%c0_3, %c0_4] : memref<16x128xbf16, #tpu.memory_space<vmem>>, vector<16x128xbf16>
    tpu.vector_store %arg3[%c0_3, %c0_4], %3 {strides = array<i32>} : memref<16x128xbf16, #tpu.memory_space<vmem>>, vector<16x128xbf16>,
    return
  }
  func.func @transform_0(%arg0: i32) -> (i32, i32) {
    %c0_i32 = arith.constant 0 : i32
    %c0_i32_0 = arith.constant 0 : i32
    return %arg0, %c0_i32 : i32, i32
  }
  func.func @transform_1(%arg0: i32) -> (i32, i32) {
    %c0_i32 = arith.constant 0 : i32
    %c0_i32_0 = arith.constant 0 : i32
    %c0_i32_1 = arith.constant 0 : i32
    return %c0_i32, %c0_i32_0 : i32, i32
  }
  func.func @transform_2(%arg0: i32) -> (i32, i32) {
    %c0_i32 = arith.constant 0 : i32
    %c0_i32_0 = arith.constant 0 : i32
    return %arg0, %c0_i32 : i32, i32
  }
}

</mosaic_0001>

<llo_original>
// kernel: tpu_custom_call.1
$region0: #{tpu_custom_call.1}
  #allocation0 [shape = 'u32[]', space=smem, size = 0x4, offset = 0x4, fixed_abs, tag = 'smem constant byte address 0x4 - core index']
  #allocation1 [shape = 'u32[144,128]{1,0:T(1,128)}', space=vmem, size = 0x12000, scoped, tag = 'internal scratch']
  %s0 = inlined_call_operand.vmem [shape: bf16[16,8], index: 0, kind: input, shape index: {}]
  %s1 = inlined_call_operand.vmem [shape: bf16[8,128], index: 1, kind: input, shape index: {}]
  %s2 = inlined_call_operand.hbm [shape: bf16[16,128], index: 2, kind: output, shape index: {}]
  %s3 = sld [smem:[#allocation0]]
  $region18: #{tpu_custom_call.1} parent=0
    _
  %s5 = ssub.s32 1, %s3
  %s6 = scalar_select 0, %s5, %s3
  $region1: #{tpu_custom_call.1} parent=0
    #allocation2 [shape = 'u8[4096]{0}', space=vmem, size = 0x1000, scoped, tag = 'output window, operand 0, single buffered']
    #allocation3 [shape = 's32[1]{0}', space=sflag, size = 0x4, scoped, tag = 'scoped memory for tpu_custom_call.1']
    %7 = vsyncpa [#allocation3], 0
    // Predicated region
    $region2: #{tpu_custom_call.1} parent=1 // pred_check
      _
    $region3: #{tpu_custom_call.1} parent=1 // pred_check_branch
      %9 = sbr.rel (0) target = $region5
    $region4: #{tpu_custom_call.1} parent=1 // pred_region
      _
    $region5: #{tpu_custom_call.1} parent=1 // pred_fallthru
      _
    // Predicated region
    $region6: #{tpu_custom_call.1} parent=1 // pred_check
      _
    $region7: #{tpu_custom_call.1} parent=1 // pred_check_branch
      %11 = sbr.rel (0) target = $region9
    $region8: #{tpu_custom_call.1} parent=1 // pred_region
      _
    $region9: #{tpu_custom_call.1} parent=1 // pred_fallthru
      _
    %v13 = vld [vmem:[%s0] sm:$0xf]
    %v14 = vld [vmem:[%s0 + $0x4] sm:$0xf]
    %v15 = vld [vmem:[%s1] sm:$0xf]
    %v18 = vunpack.c.l.b16 %v13
    %v19 = vunpack.c.l.b16 %v14
    %v20 = vpack.c.b16 %v19, %v18
    %vm21 = vcmask 64512
    %v23 = vsel %vm21, %v20, 0
    %vm25 = vcmask 1043456
    %v27 = vsel %vm25, %v15, 0
    %29 = vmatprep.subr.bf16.mxu0 0
    %30 = vmatpush1.bf16.msra.mxu0 %v27
    %31 = vmatprep.subr.bf16.mxu0 0
    %32 = vmatpush1.bf16.msra.mxu0 0
    %33 = vmatprep.subr.bf16.mxu0 0
    %34 = vmatpush1.bf16.msra.mxu0 0
    %35 = vmatprep.subr.bf16.mxu0 0
    %36 = vmatpush1.bf16.msra.mxu0 0
    %37 = vmatprep.subr.bf16.mxu0 0
    %38 = vmatpush1.bf16.msra.mxu0 0
    %39 = vmatprep.subr.bf16.mxu0 0
    %40 = vmatpush1.bf16.msra.mxu0 0
    %41 = vmatprep.subr.bf16.mxu0 0
    %42 = vmatpush1.bf16.msra.mxu0 0
    %43 = vmatprep.subr.bf16.mxu0 0
    %44 = vmatpush1.bf16.msra.mxu0 0
    %45 = vmatprep.subr.bf16.mxu0 0
    %46 = vmatpush1.bf16.msra.mxu0 0
    %47 = vmatprep.subr.bf16.mxu0 0
    %48 = vmatpush1.bf16.msra.mxu0 0
    %49 = vmatprep.subr.bf16.mxu0 0
    %50 = vmatpush1.bf16.msra.mxu0 0
    %51 = vmatprep.subr.bf16.mxu0 0
    %52 = vmatpush1.bf16.msra.mxu0 0
    %53 = vmatprep.subr.bf16.mxu0 0
    %54 = vmatpush1.bf16.msra.mxu0 0
    %55 = vmatprep.subr.bf16.mxu0 0
    %56 = vmatpush1.bf16.msra.mxu0 0
    %57 = vmatprep.subr.bf16.mxu0 0
    %58 = vmatpush1.bf16.msra.mxu0 0
    %59 = vmatprep.subr.bf16.mxu0 0
    %60 = vmatpush1.bf16.msra.mxu0 0
    %61 = vmatprep.mubr.bf16.mxu0 0
    %62 = vmatmul.mubr.bf16.gmra.mrb[0].mxu0 %v23
    %v63 = vpop.f32.mrb[0].mxu0
    %v64 = vadd.f32 0.0, %v63
    %v65 = vpop.f32.mrb[0].mxu0
    %v66 = vpop.f32.mrb[0].mxu0
    %v67 = vadd.f32 0.0, %v66
    %v68 = vpop.f32.mrb[0].mxu0
    %69 = vdwg.mxu0
    %v70 = vpack.c.bf16 %v67, %v64
    %v72 = vunpack.c.l.b16 %v70
    %v73 = vunpack.c.h.b16 %v70
    %v74 = vpack.c.b16 %v72, %v72
    %v75 = vpack.c.b16 %v73, %v73
    %78 = vst [vmem:[#allocation2] sm:$0xf] %v74
    %79 = vst [vmem:[#allocation2 + $0x4] sm:$0xf] %v75
    // Predicated region
    $region10: #{tpu_custom_call.1} parent=1 // pred_check
      _
    $region11: #{tpu_custom_call.1} parent=1 // pred_check_branch
      %81 = sbr.rel (0) target = $region13
    $region12: #{tpu_custom_call.1} parent=1 // pred_region
      %s83 = ssub.s32 128, 128
      %84 = vsyncadd [#allocation3], %s83
      %s85 = sshll.u32 [#allocation2], 4
      %s86 = int_to_ptr.vmem [resolvable:$true] %s85
      %91 = dma.vmem_to_hbm [thread:$0]  %s86, 128, %s2, [#allocation3], 64, 64, 4
    $region13: #{tpu_custom_call.1} parent=1 // pred_fallthru
      _
    // Predicated region
    $region14: #{tpu_custom_call.1} parent=1 // pred_check
      _
    $region15: #{tpu_custom_call.1} parent=1 // pred_check_branch
      %93 = sbr.rel (0) target = $region17
    $region16: #{tpu_custom_call.1} parent=1 // pred_region
      %94 = dma.done [#allocation3], 128
    $region17: #{tpu_custom_call.1} parent=1 // pred_fallthru
      _
    %95 = vsyncpa [#allocation3], 1

</llo_original>
